<compile_context>
chip_gen: v6e
topology: v6e:2x2x1
jax: 0.10.0
libtpu: 0.0.40
codegen_flags: <defaults>
</compile_context>

<pallas_src>
import functools

import jax
import jax.numpy as jnp
from jax.experimental import pallas as pl
from jax.experimental.pallas import tpu as pltpu


def _round_up(x, m):
    return (x + m - 1) // m * m


def _fused_kernel(*refs, num_layers, nl_real, eps):
    """Fused [Conv1d(k=1) -> BatchNorm1d(train) -> (ReLU)] x num_layers.

    Activation layout is (channels, batch*length); it stays VMEM/vreg resident
    across all layers (no HBM round-trip between layers).
    """
    x_ref = refs[0]                              # (C0_pad, NL_pad)  storage dtype
    w_refs = refs[1:1 + num_layers]              # each (Cout_pad, Cin_pad) f32
    g_ref = refs[1 + num_layers]                 # (num_layers, C_max, 1) gamma
    b_ref = refs[2 + num_layers]                 # (num_layers, C_max, 1) beta
    o_ref = refs[3 + num_layers]                 # (Clast_pad, NL_pad)

    nl_pad = x_ref.shape[1]
    inv_m = jnp.float32(1.0 / nl_real)           # BN uses biased (1/M) stats

    need_mask = nl_pad != nl_real
    if need_mask:
        col = jax.lax.broadcasted_iota(jnp.int32, (1, nl_pad), 1)
        lane_mask = col < nl_real                # real N*L columns

    h = x_ref[...].astype(jnp.float32)           # one-time cast (cheap on v5e too)

    for l in range(num_layers):
        w = w_refs[l][...]                       # (Cout_pad, Cin_pad) f32
        c_out = w.shape[0]

        # Conv1d(kernel_size=1) over (N, C, L) == one 2-D channel matmul on
        # the (C, N*L) slab.  Lane axis = N*L, fully fed MXU, no weight copies.
        y = jnp.dot(w, h, preferred_element_type=jnp.float32)   # (Cout, NL_pad)

        # Training-mode BatchNorm1d statistics.  Padded N*L columns are exactly
        # zero (see wrapper/relu-mask below), so no masking is needed here.
        s = jnp.sum(y, axis=1, keepdims=True)          # (Cout, 1)
        ss = jnp.sum(y * y, axis=1, keepdims=True)     # (Cout, 1)
        mean = s * inv_m
        var = jnp.maximum(ss * inv_m - mean * mean, 0.0)   # clamp cancellation

        # Fold normalize + affine into a single per-channel scale/shift.
        gamma = g_ref[l][:c_out, :]              # (Cout, 1)
        beta = b_ref[l][:c_out, :]               # (Cout, 1)
        scale = gamma * jax.lax.rsqrt(var + eps)
        shift = beta - mean * scale

        if l != num_layers - 1:
            h = jnp.maximum(y * scale + shift, 0.0)
            if need_mask:
                # keep padded columns exactly zero for the next layer's stats
                h = jnp.where(lane_mask, h, 0.0)
        else:
            # last layer: padded columns are sliced away in the wrapper
            h = y * scale + shift

    o_ref[...] = h.astype(o_ref.dtype)


def init_base_learner_params(key, in_channels, params):
    """Deterministic synthetic parameters mirroring BaseLearner.__init__ shapes."""
    layers = []
    for i, c_out in enumerate(params):
        c_in = in_channels if i == 0 else params[i - 1]
        key, kw, kb = jax.random.split(key, 3)
        bound = 1.0 / jnp.sqrt(jnp.float32(c_in))
        w = jax.random.uniform(kw, (c_out, c_in), jnp.float32, -bound, bound)
        b = jax.random.uniform(kb, (c_out,), jnp.float32, -bound, bound)
        gamma = jnp.ones((c_out,), jnp.float32)   # BatchNorm default weight
        beta = jnp.zeros((c_out,), jnp.float32)   # BatchNorm default bias
        layers.append((w, b, gamma, beta))
    return layers


def _vmem_limit_bytes():
    """Generation-aware VMEM limit (~80% of physical capacity)."""
    cap = 64 * 1024 * 1024
    try:
        info = pltpu.get_tpu_info()
        cap = int(getattr(info, "vmem_capacity_bytes", cap)) or cap
    except Exception:
        pass
    return max(int(cap * 0.8), 16 * 1024 * 1024)


def base_learner_forward(x, layer_params, eps=1e-5, storage_dtype=jnp.bfloat16):
    """x: (N, C_in, L) NCL (PyTorch layout) -> (N, C_last, L) float32."""
    n, c_in, length = x.shape
    num_layers = len(layer_params)
    c_outs = [w.shape[0] for (w, _, _, _) in layer_params]

    nl = n * length
    nl_pad = _round_up(nl, 128)                  # lane-dense N*L axis
    c_in_pad = _round_up(c_in, 8)
    c_out_pads = [_round_up(c, 8) for c in c_outs]
    c_max = max(c_out_pads)
    c_last_pad = c_out_pads[-1]

    # (N, C, L) -> (C, N*L) slab, zero-padded; stored bf16 to halve HBM bytes.
    x2d = jnp.transpose(x, (1, 0, 2)).reshape(c_in, nl).astype(storage_dtype)
    x_p = jnp.zeros((c_in_pad, nl_pad), storage_dtype).at[:c_in, :nl].set(x2d)

    # Weights stay fp32 (few KB; no bandwidth impact).  Conv bias intentionally
    # dropped: training-mode BN cancels it exactly.
    ws_p = []
    prev = c_in_pad
    for (w, _, _, _), cop in zip(layer_params, c_out_pads):
        co, ci = w.shape
        wp = jnp.zeros((cop, prev), jnp.float32).at[:co, :ci].set(
            w.astype(jnp.float32))
        ws_p.append(wp)
        prev = cop

    # Pack per-channel BN params into two stacked arrays (one DMA each).
    gammas = jnp.zeros((num_layers, c_max, 1), jnp.float32)
    betas = jnp.zeros((num_layers, c_max, 1), jnp.float32)
    for i, (_, _, g, b) in enumerate(layer_params):
        co = g.shape[0]
        gammas = gammas.at[i, :co, 0].set(g.astype(jnp.float32))
        betas = betas.at[i, :co, 0].set(b.astype(jnp.float32))

    vmem_limit = _vmem_limit_bytes()

    # Rough working set of the resident scheme: double-buffered I/O slabs,
    # double-buffered params, and a few live fp32 activation temporaries.
    sbytes = jnp.dtype(storage_dtype).itemsize
    act_bytes = 4 * max([c_in_pad] + c_out_pads) * nl_pad
    io_bytes = sbytes * (x_p.size + c_last_pad * nl_pad)
    par_bytes = 4 * (sum(w.size for w in ws_p) + gammas.size + betas.size)
    est = 2 * io_bytes + 2 * par_bytes + 4 * act_bytes + (1 << 20)
    if est > vmem_limit:
        # TODO(synk): tile the N*L axis with a grid and a two-pass BatchNorm
        # (accumulate per-channel sum/sumsq across tiles, then normalize per
        # tile), marking the tile axis "parallel" for v7x's two TensorCores.
        raise NotImplementedError(
            "Activation too large for the VMEM-resident fused path "
            f"(need ~{est} B, limit {vmem_limit} B)."
        )

    kernel = functools.partial(_fused_kernel, num_layers=num_layers,
                               nl_real=nl, eps=eps)

    in_specs = [pl.BlockSpec((c_in_pad, nl_pad), lambda i: (0, 0))]
    for wp in ws_p:
        in_specs.append(pl.BlockSpec(wp.shape, lambda i: (0, 0)))
    in_specs.append(pl.BlockSpec((num_layers, c_max, 1), lambda i: (0, 0, 0)))
    in_specs.append(pl.BlockSpec((num_layers, c_max, 1), lambda i: (0, 0, 0)))

    out_p = pl.pallas_call(
        kernel,
        out_shape=jax.ShapeDtypeStruct((c_last_pad, nl_pad), storage_dtype),
        grid=(1,),
        in_specs=in_specs,
        out_specs=pl.BlockSpec((c_last_pad, nl_pad), lambda i: (0, 0)),
        compiler_params=pltpu.CompilerParams(
            dimension_semantics=("arbitrary",),
            vmem_limit_bytes=vmem_limit),
    )(x_p, *ws_p, gammas, betas)

    out = out_p[:c_outs[-1], :nl].astype(jnp.float32)
    return jnp.transpose(out.reshape(c_outs[-1], n, length), (1, 0, 2))


def _reference_forward(x, layer_params, eps=1e-5):
    """Pure-JAX fp32 reference (keeps the conv bias; training-mode BN cancels it)."""
    h = x.astype(jnp.float32)
    num_layers = len(layer_params)
    for i, (w, b, g, be) in enumerate(layer_params):
        y = jnp.einsum('oc,ncl->nol', w, h) + b[None, :, None]
        mean = jnp.mean(y, axis=(0, 2), keepdims=True)
        var = jnp.mean((y - mean) ** 2, axis=(0, 2), keepdims=True)
        y = (y - mean) / jnp.sqrt(var + eps)
        y = g[None, :, None] * y + be[None, :, None]
        if i != num_layers - 1:
            y = jnp.maximum(y, 0.0)
        h = y
    return h


if __name__ == "__main__":
    key = jax.random.PRNGKey(0)
    key, kx = jax.random.split(key)

    # Small shapes consistent with the module: BaseLearner(4, [32, 32, 16]).
    in_channels = 4
    params = [32, 32, 16]
    batch, length = 2, 16

    x = jax.random.normal(kx, (batch, in_channels, length), jnp.float32)  # NCL
    layer_params = init_base_learner_params(key, in_channels, params)

    out = jax.jit(base_learner_forward)(x, layer_params)
    jax.block_until_ready(out)
    assert out.shape == (batch, params[-1], length)

    # Reference uses the same bf16-rounded input (the kernel's HBM storage
    # precision); tolerance additionally covers the bf16 output rounding.
    x_q = x.astype(jnp.bfloat16).astype(jnp.float32)
    ref = _reference_forward(x_q, layer_params)
    max_err = float(jnp.max(jnp.abs(out - ref)))
    assert jnp.allclose(out, ref, atol=1e-2, rtol=1e-2), max_err

    print("KERNEL_OK")
</pallas_src>

<mosaic_0001>
module attributes {stable_mosaic.version = 11 : i64} {
  func.func @_fused_kernel(%arg0: i32, %arg1: memref<8x128xbf16, #tpu.memory_space<vmem>>, %arg2: memref<32x8xf32, #tpu.memory_space<vmem>>, %arg3: memref<32x32xf32, #tpu.memory_space<vmem>>, %arg4: memref<16x32xf32, #tpu.memory_space<vmem>>, %arg5: memref<3x32x1xf32, #tpu.memory_space<vmem>>, %arg6: memref<3x32x1xf32, #tpu.memory_space<vmem>>, %arg7: memref<16x128xbf16, #tpu.memory_space<vmem>>) attributes {dimension_semantics = [#tpu.dimension_semantics<arbitrary>], iteration_bounds = array<i64: 1>, scalar_prefetch = 0 : i64, scratch_operands = 0 : i64, tpu.core_type = #tpu.core_type<tc>, window_params = [{pipeline_mode = #tpu.pipeline_mode<synchronous>, transform_indices = @transform_0, window_bounds = array<i64: 8, 128>}, {pipeline_mode = #tpu.pipeline_mode<synchronous>, transform_indices = @transform_1, window_bounds = array<i64: 32, 8>}, {pipeline_mode = #tpu.pipeline_mode<synchronous>, transform_indices = @transform_2, window_bounds = array<i64: 32, 32>}, {pipeline_mode = #tpu.pipeline_mode<synchronous>, transform_indices = @transform_3, window_bounds = array<i64: 16, 32>}, {pipeline_mode = #tpu.pipeline_mode<synchronous>, transform_indices = @transform_4, window_bounds = array<i64: 3, 32, 1>}, {pipeline_mode = #tpu.pipeline_mode<synchronous>, transform_indices = @transform_5, window_bounds = array<i64: 3, 32, 1>}, {pipeline_mode = #tpu.pipeline_mode<synchronous>, transform_indices = @transform_6, window_bounds = array<i64: 16, 128>}]} {
    %0 = tpu.iota {dimensions = array<i32: 1>} : vector<1x128xi32>
    %c32_i32 = arith.constant 32 : i32
    %1 = vector.broadcast %c32_i32 : i32 to vector<1x128xi32>
    %2 = arith.cmpi slt, %0, %1 : vector<1x128xi32>
    %c0 = arith.constant 0 : index
    %c0_0 = arith.constant 0 : index
    %3 = vector.load %arg1[%c0, %c0_0] : memref<8x128xbf16, #tpu.memory_space<vmem>>, vector<8x128xbf16>
    %4 = arith.extf %3 : vector<8x128xbf16> to vector<8x128xf32>
    %c0_1 = arith.constant 0 : index
    %c0_2 = arith.constant 0 : index
    %5 = vector.load %arg2[%c0_1, %c0_2] : memref<32x8xf32, #tpu.memory_space<vmem>>, vector<32x8xf32>
    %cst = arith.constant dense<0.000000e+00> : vector<32x128xf32>
    %6 = tpu.matmul %5, %4, %cst {dimension_numbers = #tpu.dot_dimension_numbers<[1], [0], [0], [1], [0, 0, 1, 1], [], []>} : vector<32x8xf32>, vector<8x128xf32>, vector<32x128xf32> -> vector<32x128xf32>
    %cst_3 = arith.constant dense<0.000000e+00> : vector<32xf32>
    %7 = vector.multi_reduction <add>, %6, %cst_3 [1] : vector<32x128xf32> to vector<32xf32>
    %8 = vector.shape_cast %7 : vector<32xf32> to vector<32x1xf32>
    %9 = arith.mulf %6, %6 : vector<32x128xf32>
    %cst_4 = arith.constant dense<0.000000e+00> : vector<32xf32>
    %10 = vector.multi_reduction <add>, %9, %cst_4 [1] : vector<32x128xf32> to vector<32xf32>
    %11 = vector.shape_cast %10 : vector<32xf32> to vector<32x1xf32>
    %cst_5 = arith.constant 3.125000e-02 : f32
    %12 = vector.broadcast %cst_5 : f32 to vector<32x1xf32>
    %13 = arith.mulf %8, %12 : vector<32x1xf32>
    %cst_6 = arith.constant 3.125000e-02 : f32
    %14 = vector.broadcast %cst_6 : f32 to vector<32x1xf32>
    %15 = arith.mulf %11, %14 : vector<32x1xf32>
    %16 = arith.mulf %13, %13 : vector<32x1xf32>
    %17 = arith.subf %15, %16 : vector<32x1xf32>
    %cst_7 = arith.constant 0.000000e+00 : f32
    %18 = vector.broadcast %cst_7 : f32 to vector<32x1xf32>
    %19 = arith.maximumf %17, %18 : vector<32x1xf32>
    %c0_8 = arith.constant 0 : index
    %c0_9 = arith.constant 0 : index
    %c0_10 = arith.constant 0 : index
    %20 = vector.load %arg5[%c0_8, %c0_9, %c0_10] : memref<3x32x1xf32, #tpu.memory_space<vmem>>, vector<1x32x1xf32>
    %21 = vector.shape_cast %20 : vector<1x32x1xf32> to vector<32x1xf32>
    %c0_11 = arith.constant 0 : index
    %c0_12 = arith.constant 0 : index
    %c0_13 = arith.constant 0 : index
    %22 = vector.load %arg6[%c0_11, %c0_12, %c0_13] : memref<3x32x1xf32, #tpu.memory_space<vmem>>, vector<1x32x1xf32>
    %23 = vector.shape_cast %22 : vector<1x32x1xf32> to vector<32x1xf32>
    %cst_14 = arith.constant 9.99999974E-6 : f32
    %24 = vector.broadcast %cst_14 : f32 to vector<32x1xf32>
    %25 = arith.addf %19, %24 : vector<32x1xf32>
    %26 = math.rsqrt %25 : vector<32x1xf32>
    %27 = arith.mulf %21, %26 : vector<32x1xf32>
    %28 = arith.mulf %13, %27 : vector<32x1xf32>
    %29 = arith.subf %23, %28 : vector<32x1xf32>
    %30 = vector.broadcast %27 : vector<32x1xf32> to vector<32x128xf32>
    %31 = arith.mulf %6, %30 : vector<32x128xf32>
    %32 = vector.broadcast %29 : vector<32x1xf32> to vector<32x128xf32>
    %33 = arith.addf %31, %32 : vector<32x128xf32>
    %cst_15 = arith.constant 0.000000e+00 : f32
    %34 = vector.broadcast %cst_15 : f32 to vector<32x128xf32>
    %35 = arith.maximumf %33, %34 : vector<32x128xf32>
    %cst_16 = arith.constant 0.000000e+00 : f32
    %36 = vector.shape_cast %2 : vector<1x128xi1> to vector<1x128xi1>
    %37 = vector.broadcast %36 : vector<1x128xi1> to vector<32x128xi1>
    %38 = vector.broadcast %cst_16 : f32 to vector<32x128xf32>
    %39 = arith.select %37, %35, %38 : vector<32x128xi1>, vector<32x128xf32>
    %c0_17 = arith.constant 0 : index
    %c0_18 = arith.constant 0 : index
    %40 = vector.load %arg3[%c0_17, %c0_18] : memref<32x32xf32, #tpu.memory_space<vmem>>, vector<32x32xf32>
    %cst_19 = arith.constant dense<0.000000e+00> : vector<32x128xf32>
    %41 = tpu.matmul %40, %39, %cst_19 {dimension_numbers = #tpu.dot_dimension_numbers<[1], [0], [0], [1], [0, 0, 1, 1], [], []>} : vector<32x32xf32>, vector<32x128xf32>, vector<32x128xf32> -> vector<32x128xf32>
    %cst_20 = arith.constant dense<0.000000e+00> : vector<32xf32>
    %42 = vector.multi_reduction <add>, %41, %cst_20 [1] : vector<32x128xf32> to vector<32xf32>
    %43 = vector.shape_cast %42 : vector<32xf32> to vector<32x1xf32>
    %44 = arith.mulf %41, %41 : vector<32x128xf32>
    %cst_21 = arith.constant dense<0.000000e+00> : vector<32xf32>
    %45 = vector.multi_reduction <add>, %44, %cst_21 [1] : vector<32x128xf32> to vector<32xf32>
    %46 = vector.shape_cast %45 : vector<32xf32> to vector<32x1xf32>
    %cst_22 = arith.constant 3.125000e-02 : f32
    %47 = vector.broadcast %cst_22 : f32 to vector<32x1xf32>
    %48 = arith.mulf %43, %47 : vector<32x1xf32>
    %cst_23 = arith.constant 3.125000e-02 : f32
    %49 = vector.broadcast %cst_23 : f32 to vector<32x1xf32>
    %50 = arith.mulf %46, %49 : vector<32x1xf32>
    %51 = arith.mulf %48, %48 : vector<32x1xf32>
    %52 = arith.subf %50, %51 : vector<32x1xf32>
    %cst_24 = arith.constant 0.000000e+00 : f32
    %53 = vector.broadcast %cst_24 : f32 to vector<32x1xf32>
    %54 = arith.maximumf %52, %53 : vector<32x1xf32>
    %c1 = arith.constant 1 : index
    %c0_25 = arith.constant 0 : index
    %c0_26 = arith.constant 0 : index
    %55 = vector.load %arg5[%c1, %c0_25, %c0_26] : memref<3x32x1xf32, #tpu.memory_space<vmem>>, vector<1x32x1xf32>
    %56 = vector.shape_cast %55 : vector<1x32x1xf32> to vector<32x1xf32>
    %c1_27 = arith.constant 1 : index
    %c0_28 = arith.constant 0 : index
    %c0_29 = arith.constant 0 : index
    %57 = vector.load %arg6[%c1_27, %c0_28, %c0_29] : memref<3x32x1xf32, #tpu.memory_space<vmem>>, vector<1x32x1xf32>
    %58 = vector.shape_cast %57 : vector<1x32x1xf32> to vector<32x1xf32>
    %cst_30 = arith.constant 9.99999974E-6 : f32
    %59 = vector.broadcast %cst_30 : f32 to vector<32x1xf32>
    %60 = arith.addf %54, %59 : vector<32x1xf32>
    %61 = math.rsqrt %60 : vector<32x1xf32>
    %62 = arith.mulf %56, %61 : vector<32x1xf32>
    %63 = arith.mulf %48, %62 : vector<32x1xf32>
    %64 = arith.subf %58, %63 : vector<32x1xf32>
    %65 = vector.broadcast %62 : vector<32x1xf32> to vector<32x128xf32>
    %66 = arith.mulf %41, %65 : vector<32x128xf32>
    %67 = vector.broadcast %64 : vector<32x1xf32> to vector<32x128xf32>
    %68 = arith.addf %66, %67 : vector<32x128xf32>
    %cst_31 = arith.constant 0.000000e+00 : f32
    %69 = vector.broadcast %cst_31 : f32 to vector<32x128xf32>
    %70 = arith.maximumf %68, %69 : vector<32x128xf32>
    %cst_32 = arith.constant 0.000000e+00 : f32
    %71 = vector.shape_cast %2 : vector<1x128xi1> to vector<1x128xi1>
    %72 = vector.broadcast %71 : vector<1x128xi1> to vector<32x128xi1>
    %73 = vector.broadcast %cst_32 : f32 to vector<32x128xf32>
    %74 = arith.select %72, %70, %73 : vector<32x128xi1>, vector<32x128xf32>
    %c0_33 = arith.constant 0 : index
    %c0_34 = arith.constant 0 : index
    %75 = vector.load %arg4[%c0_33, %c0_34] : memref<16x32xf32, #tpu.memory_space<vmem>>, vector<16x32xf32>
    %cst_35 = arith.constant dense<0.000000e+00> : vector<16x128xf32>
    %76 = tpu.matmul %75, %74, %cst_35 {dimension_numbers = #tpu.dot_dimension_numbers<[1], [0], [0], [1], [0, 0, 1, 1], [], []>} : vector<16x32xf32>, vector<32x128xf32>, vector<16x128xf32> -> vector<16x128xf32>
    %cst_36 = arith.constant dense<0.000000e+00> : vector<16xf32>
    %77 = vector.multi_reduction <add>, %76, %cst_36 [1] : vector<16x128xf32> to vector<16xf32>
    %78 = vector.shape_cast %77 : vector<16xf32> to vector<16x1xf32>
    %79 = arith.mulf %76, %76 : vector<16x128xf32>
    %cst_37 = arith.constant dense<0.000000e+00> : vector<16xf32>
    %80 = vector.multi_reduction <add>, %79, %cst_37 [1] : vector<16x128xf32> to vector<16xf32>
    %81 = vector.shape_cast %80 : vector<16xf32> to vector<16x1xf32>
    %cst_38 = arith.constant 3.125000e-02 : f32
    %82 = vector.broadcast %cst_38 : f32 to vector<16x1xf32>
    %83 = arith.mulf %78, %82 : vector<16x1xf32>
    %cst_39 = arith.constant 3.125000e-02 : f32
    %84 = vector.broadcast %cst_39 : f32 to vector<16x1xf32>
    %85 = arith.mulf %81, %84 : vector<16x1xf32>
    %86 = arith.mulf %83, %83 : vector<16x1xf32>
    %87 = arith.subf %85, %86 : vector<16x1xf32>
    %cst_40 = arith.constant 0.000000e+00 : f32
    %88 = vector.broadcast %cst_40 : f32 to vector<16x1xf32>
    %89 = arith.maximumf %87, %88 : vector<16x1xf32>
    %c2 = arith.constant 2 : index
    %c0_41 = arith.constant 0 : index
    %c0_42 = arith.constant 0 : index
    %90 = vector.load %arg5[%c2, %c0_41, %c0_42] : memref<3x32x1xf32, #tpu.memory_space<vmem>>, vector<1x32x1xf32>
    %91 = vector.shape_cast %90 : vector<1x32x1xf32> to vector<32x1xf32>
    %92 = vector.extract_strided_slice %91 {offsets = [0, 0], sizes = [16, 1], strides = [1, 1]} : vector<32x1xf32> to vector<16x1xf32>
    %c2_43 = arith.constant 2 : index
    %c0_44 = arith.constant 0 : index
    %c0_45 = arith.constant 0 : index
    %93 = vector.load %arg6[%c2_43, %c0_44, %c0_45] : memref<3x32x1xf32, #tpu.memory_space<vmem>>, vector<1x32x1xf32>
    %94 = vector.shape_cast %93 : vector<1x32x1xf32> to vector<32x1xf32>
    %95 = vector.extract_strided_slice %94 {offsets = [0, 0], sizes = [16, 1], strides = [1, 1]} : vector<32x1xf32> to vector<16x1xf32>
    %cst_46 = arith.constant 9.99999974E-6 : f32
    %96 = vector.broadcast %cst_46 : f32 to vector<16x1xf32>
    %97 = arith.addf %89, %96 : vector<16x1xf32>
    %98 = math.rsqrt %97 : vector<16x1xf32>
    %99 = arith.mulf %92, %98 : vector<16x1xf32>
    %100 = arith.mulf %83, %99 : vector<16x1xf32>
    %101 = arith.subf %95, %100 : vector<16x1xf32>
    %102 = vector.broadcast %99 : vector<16x1xf32> to vector<16x128xf32>
    %103 = arith.mulf %76, %102 : vector<16x128xf32>
    %104 = vector.broadcast %101 : vector<16x1xf32> to vector<16x128xf32>
    %105 = arith.addf %103, %104 : vector<16x128xf32>
    %106 = arith.truncf %105 : vector<16x128xf32> to vector<16x128xbf16>
    %c0_47 = arith.constant 0 : index
    %c0_48 = arith.constant 0 : index
    %107 = vector.load %arg7[%c0_47, %c0_48] : memref<16x128xbf16, #tpu.memory_space<vmem>>, vector<16x128xbf16>
    tpu.vector_store %arg7[%c0_47, %c0_48], %106 {strides = array<i32>} : memref<16x128xbf16, #tpu.memory_space<vmem>>, vector<16x128xbf16>,
    return
  }
  func.func @transform_0(%arg0: i32) -> (i32, i32) {
    %c0_i32 = arith.constant 0 : i32
    %c0_i32_0 = arith.constant 0 : i32
    %c0_i32_1 = arith.constant 0 : i32
    return %c0_i32, %c0_i32_0 : i32, i32
  }
  func.func @transform_1(%arg0: i32) -> (i32, i32) {
    %c0_i32 = arith.constant 0 : i32
    %c0_i32_0 = arith.constant 0 : i32
    %c0_i32_1 = arith.constant 0 : i32
    return %c0_i32, %c0_i32_0 : i32, i32
  }
  func.func @transform_2(%arg0: i32) -> (i32, i32) {
    %c0_i32 = arith.constant 0 : i32
    %c0_i32_0 = arith.constant 0 : i32
    %c0_i32_1 = arith.constant 0 : i32
    return %c0_i32, %c0_i32_0 : i32, i32
  }
  func.func @transform_3(%arg0: i32) -> (i32, i32) {
    %c0_i32 = arith.constant 0 : i32
    %c0_i32_0 = arith.constant 0 : i32
    %c0_i32_1 = arith.constant 0 : i32
    return %c0_i32, %c0_i32_0 : i32, i32
  }
  func.func @transform_4(%arg0: i32) -> (i32, i32, i32) {
    %c0_i32 = arith.constant 0 : i32
    %c0_i32_0 = arith.constant 0 : i32
    %c0_i32_1 = arith.constant 0 : i32
    %c0_i32_2 = arith.constant 0 : i32
    return %c0_i32, %c0_i32_0, %c0_i32_1 : i32, i32, i32
  }
  func.func @transform_5(%arg0: i32) -> (i32, i32, i32) {
    %c0_i32 = arith.constant 0 : i32
    %c0_i32_0 = arith.constant 0 : i32
    %c0_i32_1 = arith.constant 0 : i32
    %c0_i32_2 = arith.constant 0 : i32
    return %c0_i32, %c0_i32_0, %c0_i32_1 : i32, i32, i32
  }
  func.func @transform_6(%arg0: i32) -> (i32, i32) {
    %c0_i32 = arith.constant 0 : i32
    %c0_i32_0 = arith.constant 0 : i32
    %c0_i32_1 = arith.constant 0 : i32
    return %c0_i32, %c0_i32_0 : i32, i32
  }
}

</mosaic_0001>

<llo_original>
// kernel: base_learner_forward.1
$region0: #{base_learner_forward.1}
  #allocation0 [shape = 'u32[]', space=smem, size = 0x4, offset = 0x4, fixed_abs, tag = 'smem constant byte address 0x4 - core index']
  #allocation1 [shape = 'u32[144,128]{1,0:T(1,128)}', space=vmem, size = 0x12000, scoped, tag = 'internal scratch']
  %s0 = inlined_call_operand.vmem [shape: bf16[8,128], index: 0, kind: input, shape index: {}]
  %s1 = inlined_call_operand.vmem [shape: f32[32,8], index: 1, kind: input, shape index: {}]
  %s2 = inlined_call_operand.vmem [shape: f32[32,32], index: 2, kind: input, shape index: {}]
  %s3 = inlined_call_operand.vmem [shape: f32[16,32], index: 3, kind: input, shape index: {}]
  %s4 = inlined_call_operand.vmem [shape: f32[3,32,1], index: 4, kind: input, shape index: {}]
  %s5 = inlined_call_operand.vmem [shape: f32[3,32,1], index: 5, kind: input, shape index: {}]
  %s6 = inlined_call_operand.vmem [shape: bf16[16,128], index: 6, kind: output, shape index: {}]
  %s7 = sld [smem:[#allocation0]]
  $region34: #{base_learner_forward.1} parent=0
    _
  %s9 = ssub.s32 1, %s7
  %s10 = scalar_select 0, %s9, %s7
  // Predicated region
  $region2: #{base_learner_forward.1} parent=0 // pred_check
    _
  $region3: #{base_learner_forward.1} parent=0 // pred_check_branch
    %12 = sbr.rel (0) target = $region5
  $region4: #{base_learner_forward.1} parent=0 // pred_region
    _
  $region5: #{base_learner_forward.1} parent=0 // pred_fallthru
    _
  // Predicated region
  $region6: #{base_learner_forward.1} parent=0 // pred_check
    _
  $region7: #{base_learner_forward.1} parent=0 // pred_check_branch
    %14 = sbr.rel (0) target = $region9
  $region8: #{base_learner_forward.1} parent=0 // pred_region
    _
  $region9: #{base_learner_forward.1} parent=0 // pred_fallthru
    _
  // Predicated region
  $region10: #{base_learner_forward.1} parent=0 // pred_check
    _
  $region11: #{base_learner_forward.1} parent=0 // pred_check_branch
    %16 = sbr.rel (0) target = $region13
  $region12: #{base_learner_forward.1} parent=0 // pred_region
    _
  $region13: #{base_learner_forward.1} parent=0 // pred_fallthru
    _
  // Predicated region
  $region14: #{base_learner_forward.1} parent=0 // pred_check
    _
  $region15: #{base_learner_forward.1} parent=0 // pred_check_branch
    %18 = sbr.rel (0) target = $region17
  $region16: #{base_learner_forward.1} parent=0 // pred_region
    _
  $region17: #{base_learner_forward.1} parent=0 // pred_fallthru
    _
  // Predicated region
  $region18: #{base_learner_forward.1} parent=0 // pred_check
    _
  $region19: #{base_learner_forward.1} parent=0 // pred_check_branch
    %20 = sbr.rel (0) target = $region21
  $region20: #{base_learner_forward.1} parent=0 // pred_region
    _
  $region21: #{base_learner_forward.1} parent=0 // pred_fallthru
    _
  // Predicated region
  $region22: #{base_learner_forward.1} parent=0 // pred_check
    _
  $region23: #{base_learner_forward.1} parent=0 // pred_check_branch
    %22 = sbr.rel (0) target = $region25
  $region24: #{base_learner_forward.1} parent=0 // pred_region
    _
  $region25: #{base_learner_forward.1} parent=0 // pred_fallthru
    _
  %v23 = vlaneseq
  %v24 = vand.u32 %v23, 127
  %vm25 = vcmp.lt.s32.totalorder %v24, 32
  %v26 = vld [vmem:[%s0] sm:$0xf]
  %v27 = vunpack.c.l.bf16 %v26
  %v28 = vld [vmem:[%s1] sm:$0xff]
  %v29 = vld [vmem:[%s1 + $0x8] sm:$0xff]
  %v30 = vld [vmem:[%s1 + $0x10] sm:$0xff]
  %v31 = vld [vmem:[%s1 + $0x18] sm:$0xff]
  %vm32 = vcmask 64512
  %v34 = vsel %vm32, %v28, 0
  %v37 = vsel %vm32, %v29, 0
  %v40 = vsel %vm32, %v30, 0
  %v43 = vsel %vm32, %v31, 0
  %45 = vmatprep.subr.mxu0 0.0
  %46 = vmatpush1.msra.mxu0 0.0
  %47 = vmatprep.subr.mxu0 0.0
  %48 = vmatpush1.msra.mxu0 0.0
  %49 = vmatprep.subr.mxu0 0.0
  %50 = vmatpush1.msra.mxu0 0.0
  %51 = vmatprep.subr.mxu0 0.0
  %52 = vmatpush1.msra.mxu0 0.0
  %53 = vmatprep.subr.mxu0 0.0
  %54 = vmatpush1.msra.mxu0 0.0
  %55 = vmatprep.subr.mxu0 0.0
  %56 = vmatpush1.msra.mxu0 0.0
  %57 = vmatprep.subr.mxu0 0.0
  %58 = vmatpush1.msra.mxu0 0.0
  %59 = vmatprep.subr.mxu0 0.0
  %60 = vmatpush1.msra.mxu0 0.0
  %61 = vmatprep.subr.mxu0 0.0
  %62 = vmatpush1.msra.mxu0 0.0
  %63 = vmatprep.subr.mxu0 0.0
  %64 = vmatpush1.msra.mxu0 0.0
  %65 = vmatprep.subr.mxu0 0.0
  %66 = vmatpush1.msra.mxu0 0.0
  %67 = vmatprep.subr.mxu0 0.0
  %68 = vmatpush1.msra.mxu0 0.0
  %69 = vmatprep.subr.mxu0 0.0
  %70 = vmatpush1.msra.mxu0 0.0
  %71 = vmatprep.subr.mxu0 0.0
  %72 = vmatpush1.msra.mxu0 0.0
  %73 = vmatprep.subr.mxu0 0.0
  %74 = vmatpush1.msra.mxu0 0.0
  %75 = vmatprep.subr.mxu0 0.0
  %76 = vmatpush1.msra.mxu0 %v27
  %77 = vmatprep.subr.mxu0 0.0
  %78 = vmatpush2.msra.mxu0 0.0
  %79 = vmatprep.subr.mxu0 0.0
  %80 = vmatpush2.msra.mxu0 0.0
  %81 = vmatprep.subr.mxu0 0.0
  %82 = vmatpush2.msra.mxu0 0.0
  %83 = vmatprep.subr.mxu0 0.0
  %84 = vmatpush2.msra.mxu0 0.0
  %85 = vmatprep.subr.mxu0 0.0
  %86 = vmatpush2.msra.mxu0 0.0
  %87 = vmatprep.subr.mxu0 0.0
  %88 = vmatpush2.msra.mxu0 0.0
  %89 = vmatprep.subr.mxu0 0.0
  %90 = vmatpush2.msra.mxu0 0.0
  %91 = vmatprep.subr.mxu0 0.0
  %92 = vmatpush2.msra.mxu0 0.0
  %93 = vmatprep.subr.mxu0 0.0
  %94 = vmatpush2.msra.mxu0 0.0
  %95 = vmatprep.subr.mxu0 0.0
  %96 = vmatpush2.msra.mxu0 0.0
  %97 = vmatprep.subr.mxu0 0.0
  %98 = vmatpush2.msra.mxu0 0.0
  %99 = vmatprep.subr.mxu0 0.0
  %100 = vmatpush2.msra.mxu0 0.0
  %101 = vmatprep.subr.mxu0 0.0
  %102 = vmatpush2.msra.mxu0 0.0
  %103 = vmatprep.subr.mxu0 0.0
  %104 = vmatpush2.msra.mxu0 0.0
  %105 = vmatprep.subr.mxu0 0.0
  %106 = vmatpush2.msra.mxu0 0.0
  %107 = vmatprep.subr.mxu0 0.0
  %108 = vmatpush2.msra.mxu0 0.0
  %109 = vmatprep.mubr.f32.mxu0 0.0
  %110 = vmatmul.mubr.f32.gmra.mxu0 %v34
  %v111 = vpop.f32.mrf.mxu0
  %v112 = vadd.f32 0.0, %v111
  %v113 = vpop.f32.mrf.mxu0
  %114 = vmatprep.mubr.f32.mxu0 0.0
  %115 = vmatmul.mubr.f32.gmra.mxu0 %v37
  %v116 = vpop.f32.mrf.mxu0
  %v117 = vadd.f32 0.0, %v116
  %v118 = vpop.f32.mrf.mxu0
  %119 = vmatprep.mubr.f32.mxu0 0.0
  %120 = vmatmul.mubr.f32.gmra.mxu0 %v40
  %v121 = vpop.f32.mrf.mxu0
  %v122 = vadd.f32 0.0, %v121
  %v123 = vpop.f32.mrf.mxu0
  %124 = vmatprep.mubr.f32.mxu0 0.0
  %125 = vmatmul.mubr.f32.gmra.mxu0 %v43
  %v126 = vpop.f32.mrf.mxu0
  %v127 = vadd.f32 0.0, %v126
  %v128 = vpop.f32.mrf.mxu0
  %129 = vdwg.mxu0
  %130 = vadd.xlane.f32.xlu0 %v112
  %v131 = vpop.xlane.xlu0 %130
  %132 = vadd.xlane.f32.xlu0 %v117
  %v133 = vpop.xlane.xlu0 %132
  %134 = vadd.xlane.f32.xlu0 %v122
  %v135 = vpop.xlane.xlu0 %134
  %136 = vadd.xlane.f32.xlu0 %v127
  %v137 = vpop.xlane.xlu0 %136
  %v138 = vmul.f32 %v112, %v112
  %v139 = vmul.f32 %v117, %v117
  %v140 = vmul.f32 %v122, %v122
  %v141 = vmul.f32 %v127, %v127
  %142 = vadd.xlane.f32.xlu0 %v138
  %v143 = vpop.xlane.xlu0 %142
  %144 = vadd.xlane.f32.xlu0 %v139
  %v145 = vpop.xlane.xlu0 %144
  %146 = vadd.xlane.f32.xlu0 %v140
  %v147 = vpop.xlane.xlu0 %146
  %148 = vadd.xlane.f32.xlu0 %v141
  %v149 = vpop.xlane.xlu0 %148
  %v150 = vmul.f32 %v131, 0.03125
  %v151 = vmul.f32 %v133, 0.03125
  %v152 = vmul.f32 %v135, 0.03125
  %v153 = vmul.f32 %v137, 0.03125
  %v154 = vmul.f32 %v143, 0.03125
  %v155 = vmul.f32 %v145, 0.03125
  %v156 = vmul.f32 %v147, 0.03125
  %v157 = vmul.f32 %v149, 0.03125
  %v158 = vmul.f32 %v150, %v150
  %v159 = vmul.f32 %v151, %v151
  %v160 = vmul.f32 %v152, %v152
  %v161 = vmul.f32 %v153, %v153
  %v162 = vsub.f32 %v154, %v158
  %v163 = vsub.f32 %v155, %v159
  %v164 = vsub.f32 %v156, %v160
  %v165 = vsub.f32 %v157, %v161
  %v166 = vmax.f32 %v162, 0.0
  %v167 = vmax.f32 %v163, 0.0
  %v168 = vmax.f32 %v164, 0.0
  %v169 = vmax.f32 %v165, 0.0
  %v170 = vld [vmem:[%s4] sm:$0xff]
  %v171 = vld [vmem:[%s4 + $0x8] sm:$0xff]
  %v172 = vld [vmem:[%s4 + $0x10] sm:$0xff]
  %v173 = vld [vmem:[%s4 + $0x18] sm:$0xff]
  %v174 = vld [vmem:[%s5] sm:$0xff]
  %v175 = vld [vmem:[%s5 + $0x8] sm:$0xff]
  %v176 = vld [vmem:[%s5 + $0x10] sm:$0xff]
  %v177 = vld [vmem:[%s5 + $0x18] sm:$0xff]
  %v178 = vadd.f32 %v166, 1e-05
  %v179 = vadd.f32 %v167, 1e-05
  %v180 = vadd.f32 %v168, 1e-05
  %v181 = vadd.f32 %v169, 1e-05
  %v182 = vrsqrt.pop %v178
  %v183 = vrsqrt.pop %v179
  %v184 = vrsqrt.pop %v180
  %v185 = vrsqrt.pop %v181
  %v186 = vmul.f32 %v170, %v182
  %v187 = vmul.f32 %v171, %v183
  %v188 = vmul.f32 %v172, %v184
  %v189 = vmul.f32 %v173, %v185
  %v190 = vmul.f32 %v150, %v186
  %v191 = vmul.f32 %v151, %v187
  %v192 = vmul.f32 %v152, %v188
  %v193 = vmul.f32 %v153, %v189
  %v194 = vsub.f32 %v174, %v190
  %v195 = vsub.f32 %v175, %v191
  %v196 = vsub.f32 %v176, %v192
  %v197 = vsub.f32 %v177, %v193
  %199 = vset.pattern.permute.xlu0 0
  %200 = vperm.xlu0 %199, %v186
  %v201 = vpop.permute.xlu0 %200
  %204 = vset.pattern.permute.xlu0 0
  %205 = vperm.xlu0 %204, %v187
  %v206 = vpop.permute.xlu0 %205
  %209 = vset.pattern.permute.xlu0 0
  %210 = vperm.xlu0 %209, %v188
  %v211 = vpop.permute.xlu0 %210
  %214 = vset.pattern.permute.xlu0 0
  %215 = vperm.xlu0 %214, %v189
  %v216 = vpop.permute.xlu0 %215
  %v218 = vmul.f32 %v112, %v201
  %v219 = vmul.f32 %v117, %v206
  %v220 = vmul.f32 %v122, %v211
  %v221 = vmul.f32 %v127, %v216
  %223 = vset.pattern.permute.xlu0 0
  %224 = vperm.xlu0 %223, %v194
  %v225 = vpop.permute.xlu0 %224
  %228 = vset.pattern.permute.xlu0 0
  %229 = vperm.xlu0 %228, %v195
  %v230 = vpop.permute.xlu0 %229
  %233 = vset.pattern.permute.xlu0 0
  %234 = vperm.xlu0 %233, %v196
  %v235 = vpop.permute.xlu0 %234
  %238 = vset.pattern.permute.xlu0 0
  %239 = vperm.xlu0 %238, %v197
  %v240 = vpop.permute.xlu0 %239
  %v242 = vadd.f32 %v218, %v225
  %v243 = vadd.f32 %v219, %v230
  %v244 = vadd.f32 %v220, %v235
  %v245 = vadd.f32 %v221, %v240
  %v246 = vmax.f32 %v242, 0.0
  %v247 = vmax.f32 %v243, 0.0
  %v248 = vmax.f32 %v244, 0.0
  %v249 = vmax.f32 %v245, 0.0
  %v250 = vsel %vm25, 1, 0
  %vm251 = vcmp.eq.s32.totalorder %v250, 1
  %v252 = vsel %vm251, %v246, 0.0
  %v253 = vsel %vm251, %v247, 0.0
  %v254 = vsel %vm251, %v248, 0.0
  %v255 = vsel %vm251, %v249, 0.0
  %v256 = vld [vmem:[%s2] sm:$0xff]
  %v257 = vld [vmem:[%s2 + $0x8] sm:$0xff]
  %v258 = vld [vmem:[%s2 + $0x10] sm:$0xff]
  %v259 = vld [vmem:[%s2 + $0x18] sm:$0xff]
  %vm260 = vcmask 261120
  %v262 = vsel %vm260, %v256, 0
  %v265 = vsel %vm260, %v257, 0
  %v268 = vsel %vm260, %v258, 0
  %v271 = vsel %vm260, %v259, 0
  %273 = vmatprep.subr.mxu0 0.0
  %274 = vmatpush1.msra.mxu0 0.0
  %275 = vmatprep.subr.mxu0 0.0
  %276 = vmatpush1.msra.mxu0 0.0
  %277 = vmatprep.subr.mxu0 0.0
  %278 = vmatpush1.msra.mxu0 0.0
  %279 = vmatprep.subr.mxu0 0.0
  %280 = vmatpush1.msra.mxu0 0.0
  %281 = vmatprep.subr.mxu0 0.0
  %282 = vmatpush1.msra.mxu0 0.0
  %283 = vmatprep.subr.mxu0 0.0
  %284 = vmatpush1.msra.mxu0 0.0
  %285 = vmatprep.subr.mxu0 0.0
  %286 = vmatpush1.msra.mxu0 0.0
  %287 = vmatprep.subr.mxu0 0.0
  %288 = vmatpush1.msra.mxu0 0.0
  %289 = vmatprep.subr.mxu0 0.0
  %290 = vmatpush1.msra.mxu0 0.0
  %291 = vmatprep.subr.mxu0 0.0
  %292 = vmatpush1.msra.mxu0 0.0
  %293 = vmatprep.subr.mxu0 0.0
  %294 = vmatpush1.msra.mxu0 0.0
  %295 = vmatprep.subr.mxu0 0.0
  %296 = vmatpush1.msra.mxu0 0.0
  %297 = vmatprep.subr.mxu0 0.0
  %298 = vmatpush1.msra.mxu0 %v255
  %299 = vmatprep.subr.mxu0 0.0
  %300 = vmatpush1.msra.mxu0 %v254
  %301 = vmatprep.subr.mxu0 0.0
  %302 = vmatpush1.msra.mxu0 %v253
  %303 = vmatprep.subr.mxu0 0.0
  %304 = vmatpush1.msra.mxu0 %v252
  %305 = vmatprep.subr.mxu0 0.0
  %306 = vmatpush2.msra.mxu0 0.0
  %307 = vmatprep.subr.mxu0 0.0
  %308 = vmatpush2.msra.mxu0 0.0
  %309 = vmatprep.subr.mxu0 0.0
  %310 = vmatpush2.msra.mxu0 0.0
  %311 = vmatprep.subr.mxu0 0.0
  %312 = vmatpush2.msra.mxu0 0.0
  %313 = vmatprep.subr.mxu0 0.0
  %314 = vmatpush2.msra.mxu0 0.0
  %315 = vmatprep.subr.mxu0 0.0
  %316 = vmatpush2.msra.mxu0 0.0
  %317 = vmatprep.subr.mxu0 0.0
  %318 = vmatpush2.msra.mxu0 0.0
  %319 = vmatprep.subr.mxu0 0.0
  %320 = vmatpush2.msra.mxu0 0.0
  %321 = vmatprep.subr.mxu0 0.0
  %322 = vmatpush2.msra.mxu0 0.0
  %323 = vmatprep.subr.mxu0 0.0
  %324 = vmatpush2.msra.mxu0 0.0
  %325 = vmatprep.subr.mxu0 0.0
  %326 = vmatpush2.msra.mxu0 0.0
  %327 = vmatprep.subr.mxu0 0.0
  %328 = vmatpush2.msra.mxu0 0.0
  %329 = vmatprep.subr.mxu0 0.0
  %330 = vmatpush2.msra.mxu0 0.0
  %331 = vmatprep.subr.mxu0 0.0
  %332 = vmatpush2.msra.mxu0 0.0
  %333 = vmatprep.subr.mxu0 0.0
  %334 = vmatpush2.msra.mxu0 0.0
  %335 = vmatprep.subr.mxu0 0.0
  %336 = vmatpush2.msra.mxu0 0.0
  %337 = vmatprep.mubr.f32.mxu0 0.0
  %338 = vmatmul.mubr.f32.gmra.mxu0 %v262
  %v339 = vpop.f32.mrf.mxu0
  %v340 = vadd.f32 0.0, %v339
  %v341 = vpop.f32.mrf.mxu0
  %342 = vmatprep.mubr.f32.mxu0 0.0
  %343 = vmatmul.mubr.f32.gmra.mxu0 %v265
  %v344 = vpop.f32.mrf.mxu0
  %v345 = vadd.f32 0.0, %v344
  %v346 = vpop.f32.mrf.mxu0
  %347 = vmatprep.mubr.f32.mxu0 0.0
  %348 = vmatmul.mubr.f32.gmra.mxu0 %v268
  %v349 = vpop.f32.mrf.mxu0
  %v350 = vadd.f32 0.0, %v349
  %v351 = vpop.f32.mrf.mxu0
  %352 = vmatprep.mubr.f32.mxu0 0.0
  %353 = vmatmul.mubr.f32.gmra.mxu0 %v271
  %v354 = vpop.f32.mrf.mxu0
  %v355 = vadd.f32 0.0, %v354
  %v356 = vpop.f32.mrf.mxu0
  %357 = vdwg.mxu0
  %358 = vadd.xlane.f32.xlu0 %v340
  %v359 = vpop.xlane.xlu0 %358
  %360 = vadd.xlane.f32.xlu0 %v345
  %v361 = vpop.xlane.xlu0 %360
  %362 = vadd.xlane.f32.xlu0 %v350
  %v363 = vpop.xlane.xlu0 %362
  %364 = vadd.xlane.f32.xlu0 %v355
  %v365 = vpop.xlane.xlu0 %364
  %v366 = vmul.f32 %v340, %v340
  %v367 = vmul.f32 %v345, %v345
  %v368 = vmul.f32 %v350, %v350
  %v369 = vmul.f32 %v355, %v355
  %370 = vadd.xlane.f32.xlu0 %v366
  %v371 = vpop.xlane.xlu0 %370
  %372 = vadd.xlane.f32.xlu0 %v367
  %v373 = vpop.xlane.xlu0 %372
  %374 = vadd.xlane.f32.xlu0 %v368
  %v375 = vpop.xlane.xlu0 %374
  %376 = vadd.xlane.f32.xlu0 %v369
  %v377 = vpop.xlane.xlu0 %376
  %v378 = vmul.f32 %v359, 0.03125
  %v379 = vmul.f32 %v361, 0.03125
  %v380 = vmul.f32 %v363, 0.03125
  %v381 = vmul.f32 %v365, 0.03125
  %v382 = vmul.f32 %v371, 0.03125
  %v383 = vmul.f32 %v373, 0.03125
  %v384 = vmul.f32 %v375, 0.03125
  %v385 = vmul.f32 %v377, 0.03125
  %v386 = vmul.f32 %v378, %v378
  %v387 = vmul.f32 %v379, %v379
  %v388 = vmul.f32 %v380, %v380
  %v389 = vmul.f32 %v381, %v381
  %v390 = vsub.f32 %v382, %v386
  %v391 = vsub.f32 %v383, %v387
  %v392 = vsub.f32 %v384, %v388
  %v393 = vsub.f32 %v385, %v389
  %v394 = vmax.f32 %v390, 0.0
  %v395 = vmax.f32 %v391, 0.0
  %v396 = vmax.f32 %v392, 0.0
  %v397 = vmax.f32 %v393, 0.0
  %s398 = scalar_lea.vmem %s4, 32
  %v399 = vld [vmem:[%s398] sm:$0xff]
  %v400 = vld [vmem:[%s398 + $0x8] sm:$0xff]
  %v401 = vld [vmem:[%s398 + $0x10] sm:$0xff]
  %v402 = vld [vmem:[%s398 + $0x18] sm:$0xff]
  %s403 = scalar_lea.vmem %s5, 32
  %v404 = vld [vmem:[%s403] sm:$0xff]
  %v405 = vld [vmem:[%s403 + $0x8] sm:$0xff]
  %v406 = vld [vmem:[%s403 + $0x10] sm:$0xff]
  %v407 = vld [vmem:[%s403 + $0x18] sm:$0xff]
  %v408 = vadd.f32 %v394, 1e-05
  %v409 = vadd.f32 %v395, 1e-05
  %v410 = vadd.f32 %v396, 1e-05
  %v411 = vadd.f32 %v397, 1e-05
  %v412 = vrsqrt.pop %v408
  %v413 = vrsqrt.pop %v409
  %v414 = vrsqrt.pop %v410
  %v415 = vrsqrt.pop %v411
  %v416 = vmul.f32 %v399, %v412
  %v417 = vmul.f32 %v400, %v413
  %v418 = vmul.f32 %v401, %v414
  %v419 = vmul.f32 %v402, %v415
  %v420 = vmul.f32 %v378, %v416
  %v421 = vmul.f32 %v379, %v417
  %v422 = vmul.f32 %v380, %v418
  %v423 = vmul.f32 %v381, %v419
  %v424 = vsub.f32 %v404, %v420
  %v425 = vsub.f32 %v405, %v421
  %v426 = vsub.f32 %v406, %v422
  %v427 = vsub.f32 %v407, %v423
  %429 = vset.pattern.permute.xlu0 0
  %430 = vperm.xlu0 %429, %v416
  %v431 = vpop.permute.xlu0 %430
  %434 = vset.pattern.permute.xlu0 0
  %435 = vperm.xlu0 %434, %v417
  %v436 = vpop.permute.xlu0 %435
  %439 = vset.pattern.permute.xlu0 0
  %440 = vperm.xlu0 %439, %v418
  %v441 = vpop.permute.xlu0 %440
  %444 = vset.pattern.permute.xlu0 0
  %445 = vperm.xlu0 %444, %v419
  %v446 = vpop.permute.xlu0 %445
  %v448 = vmul.f32 %v340, %v431
  %v449 = vmul.f32 %v345, %v436
  %v450 = vmul.f32 %v350, %v441
  %v451 = vmul.f32 %v355, %v446
  %453 = vset.pattern.permute.xlu0 0
  %454 = vperm.xlu0 %453, %v424
  %v455 = vpop.permute.xlu0 %454
  %458 = vset.pattern.permute.xlu0 0
  %459 = vperm.xlu0 %458, %v425
  %v460 = vpop.permute.xlu0 %459
  %463 = vset.pattern.permute.xlu0 0
  %464 = vperm.xlu0 %463, %v426
  %v465 = vpop.permute.xlu0 %464
  %468 = vset.pattern.permute.xlu0 0
  %469 = vperm.xlu0 %468, %v427
  %v470 = vpop.permute.xlu0 %469
  %v472 = vadd.f32 %v448, %v455
  %v473 = vadd.f32 %v449, %v460
  %v474 = vadd.f32 %v450, %v465
  %v475 = vadd.f32 %v451, %v470
  %v476 = vmax.f32 %v472, 0.0
  %v477 = vmax.f32 %v473, 0.0
  %v478 = vmax.f32 %v474, 0.0
  %v479 = vmax.f32 %v475, 0.0
  %v480 = vsel %vm251, %v476, 0.0
  %v481 = vsel %vm251, %v477, 0.0
  %v482 = vsel %vm251, %v478, 0.0
  %v483 = vsel %vm251, %v479, 0.0
  %v484 = vld [vmem:[%s3] sm:$0xff]
  %v485 = vld [vmem:[%s3 + $0x8] sm:$0xff]
  %v487 = vsel %vm260, %v484, 0
  %v490 = vsel %vm260, %v485, 0
  %492 = vmatprep.subr.mxu0 0.0
  %493 = vmatpush1.msra.mxu0 0.0
  %494 = vmatprep.subr.mxu0 0.0
  %495 = vmatpush1.msra.mxu0 0.0
  %496 = vmatprep.subr.mxu0 0.0
  %497 = vmatpush1.msra.mxu0 0.0
  %498 = vmatprep.subr.mxu0 0.0
  %499 = vmatpush1.msra.mxu0 0.0
  %500 = vmatprep.subr.mxu0 0.0
  %501 = vmatpush1.msra.mxu0 0.0
  %502 = vmatprep.subr.mxu0 0.0
  %503 = vmatpush1.msra.mxu0 0.0
  %504 = vmatprep.subr.mxu0 0.0
  %505 = vmatpush1.msra.mxu0 0.0
  %506 = vmatprep.subr.mxu0 0.0
  %507 = vmatpush1.msra.mxu0 0.0
  %508 = vmatprep.subr.mxu0 0.0
  %509 = vmatpush1.msra.mxu0 0.0
  %510 = vmatprep.subr.mxu0 0.0
  %511 = vmatpush1.msra.mxu0 0.0
  %512 = vmatprep.subr.mxu0 0.0
  %513 = vmatpush1.msra.mxu0 0.0
  %514 = vmatprep.subr.mxu0 0.0
  %515 = vmatpush1.msra.mxu0 0.0
  %516 = vmatprep.subr.mxu0 0.0
  %517 = vmatpush1.msra.mxu0 %v483
  %518 = vmatprep.subr.mxu0 0.0
  %519 = vmatpush1.msra.mxu0 %v482
  %520 = vmatprep.subr.mxu0 0.0
  %521 = vmatpush1.msra.mxu0 %v481
  %522 = vmatprep.subr.mxu0 0.0
  %523 = vmatpush1.msra.mxu0 %v480
  %524 = vmatprep.subr.mxu0 0.0
  %525 = vmatpush2.msra.mxu0 0.0
  %526 = vmatprep.subr.mxu0 0.0
  %527 = vmatpush2.msra.mxu0 0.0
  %528 = vmatprep.subr.mxu0 0.0
  %529 = vmatpush2.msra.mxu0 0.0
  %530 = vmatprep.subr.mxu0 0.0
  %531 = vmatpush2.msra.mxu0 0.0
  %532 = vmatprep.subr.mxu0 0.0
  %533 = vmatpush2.msra.mxu0 0.0
  %534 = vmatprep.subr.mxu0 0.0
  %535 = vmatpush2.msra.mxu0 0.0
  %536 = vmatprep.subr.mxu0 0.0
  %537 = vmatpush2.msra.mxu0 0.0
  %538 = vmatprep.subr.mxu0 0.0
  %539 = vmatpush2.msra.mxu0 0.0
  %540 = vmatprep.subr.mxu0 0.0
  %541 = vmatpush2.msra.mxu0 0.0
  %542 = vmatprep.subr.mxu0 0.0
  %543 = vmatpush2.msra.mxu0 0.0
  %544 = vmatprep.subr.mxu0 0.0
  %545 = vmatpush2.msra.mxu0 0.0
  %546 = vmatprep.subr.mxu0 0.0
  %547 = vmatpush2.msra.mxu0 0.0
  %548 = vmatprep.subr.mxu0 0.0
  %549 = vmatpush2.msra.mxu0 0.0
  %550 = vmatprep.subr.mxu0 0.0
  %551 = vmatpush2.msra.mxu0 0.0
  %552 = vmatprep.subr.mxu0 0.0
  %553 = vmatpush2.msra.mxu0 0.0
  %554 = vmatprep.subr.mxu0 0.0
  %555 = vmatpush2.msra.mxu0 0.0
  %556 = vmatprep.mubr.f32.mxu0 0.0
  %557 = vmatmul.mubr.f32.gmra.mxu0 %v487
  %v558 = vpop.f32.mrf.mxu0
  %v559 = vadd.f32 0.0, %v558
  %v560 = vpop.f32.mrf.mxu0
  %561 = vmatprep.mubr.f32.mxu0 0.0
  %562 = vmatmul.mubr.f32.gmra.mxu0 %v490
  %v563 = vpop.f32.mrf.mxu0
  %v564 = vadd.f32 0.0, %v563
  %v565 = vpop.f32.mrf.mxu0
  %566 = vdwg.mxu0
  %567 = vadd.xlane.f32.xlu0 %v559
  %v568 = vpop.xlane.xlu0 %567
  %569 = vadd.xlane.f32.xlu0 %v564
  %v570 = vpop.xlane.xlu0 %569
  %v571 = vmul.f32 %v559, %v559
  %v572 = vmul.f32 %v564, %v564
  %573 = vadd.xlane.f32.xlu0 %v571
  %v574 = vpop.xlane.xlu0 %573
  %575 = vadd.xlane.f32.xlu0 %v572
  %v576 = vpop.xlane.xlu0 %575
  %v577 = vmul.f32 %v568, 0.03125
  %v578 = vmul.f32 %v570, 0.03125
  %v579 = vmul.f32 %v574, 0.03125
  %v580 = vmul.f32 %v576, 0.03125
  %v581 = vmul.f32 %v577, %v577
  %v582 = vmul.f32 %v578, %v578
  %v583 = vsub.f32 %v579, %v581
  %v584 = vsub.f32 %v580, %v582
  %v585 = vmax.f32 %v583, 0.0
  %v586 = vmax.f32 %v584, 0.0
  %s587 = scalar_lea.vmem %s4, 64
  %v588 = vld [vmem:[%s587] sm:$0xff]
  %v589 = vld [vmem:[%s587 + $0x8] sm:$0xff]
  %s590 = scalar_lea.vmem %s5, 64
  %v591 = vld [vmem:[%s590] sm:$0xff]
  %v592 = vld [vmem:[%s590 + $0x8] sm:$0xff]
  %v593 = vadd.f32 %v585, 1e-05
  %v594 = vadd.f32 %v586, 1e-05
  %v595 = vrsqrt.pop %v593
  %v596 = vrsqrt.pop %v594
  %v597 = vmul.f32 %v588, %v595
  %v598 = vmul.f32 %v589, %v596
  %v599 = vmul.f32 %v577, %v597
  %v600 = vmul.f32 %v578, %v598
  %v601 = vsub.f32 %v591, %v599
  %v602 = vsub.f32 %v592, %v600
  %604 = vset.pattern.permute.xlu0 0
  %605 = vperm.xlu0 %604, %v597
  %v606 = vpop.permute.xlu0 %605
  %609 = vset.pattern.permute.xlu0 0
  %610 = vperm.xlu0 %609, %v598
  %v611 = vpop.permute.xlu0 %610
  %v613 = vmul.f32 %v559, %v606
  %v614 = vmul.f32 %v564, %v611
  %616 = vset.pattern.permute.xlu0 0
  %617 = vperm.xlu0 %616, %v601
  %v618 = vpop.permute.xlu0 %617
  %621 = vset.pattern.permute.xlu0 0
  %622 = vperm.xlu0 %621, %v602
  %v623 = vpop.permute.xlu0 %622
  %v625 = vadd.f32 %v613, %v618
  %v626 = vadd.f32 %v614, %v623
  %v627 = vpack.c.bf16 %v626, %v625
  %v629 = vunpack.c.l.b16 %v627
  %v630 = vunpack.c.h.b16 %v627
  %v631 = vpack.c.b16 %v629, %v629
  %v632 = vpack.c.b16 %v630, %v630
  %635 = vst [vmem:[%s6] sm:$0xf] %v631
  %636 = vst [vmem:[%s6 + $0x4] sm:$0xf] %v632
  // Predicated region
  $region26: #{base_learner_forward.1} parent=0 // pred_check
    _
  $region27: #{base_learner_forward.1} parent=0 // pred_check_branch
    %638 = sbr.rel (0) target = $region29
  $region28: #{base_learner_forward.1} parent=0 // pred_region
    _
  $region29: #{base_learner_forward.1} parent=0 // pred_fallthru
    _
  // Predicated region
  $region30: #{base_learner_forward.1} parent=0 // pred_check
    _
  $region31: #{base_learner_forward.1} parent=0 // pred_check_branch
    %640 = sbr.rel (0) target = $region33
  $region32: #{base_learner_forward.1} parent=0 // pred_region
    _
  $region33: #{base_learner_forward.1} parent=0 // pred_fallthru
    _

</llo_original>
